<compile_context>
chip_gen: v7x
topology: tpu7x:2x2x1
jax: 0.10.0
libtpu: 0.0.40
codegen_flags: <defaults>
</compile_context>

<pallas_src>
import functools

import jax
import jax.numpy as jnp
from jax import lax
from jax.experimental import pallas as pl
from jax.experimental.pallas import tpu as pltpu

_MIB = 1024 * 1024


def _vmem_budgets():
    """(tile_budget_bytes, vmem_limit_bytes) derived from this chip's VMEM."""
    phys = 128 * _MIB
    try:
        info = pltpu.get_tpu_info()
        for name in ("vmem_capacity_bytes", "vmem_size_bytes", "vmem_bytes"):
            val = getattr(info, name, None)
            if isinstance(val, (int, float)) and val > 0:
                phys = int(val)
                break
    except Exception:
        pass  # keep the conservative default
    # ~40 MiB of pipelined blocks on 128-MiB parts (v5e/v6e), ~20 MiB on
    # 64-MiB parts (v7x); leave headroom for compiler-internal scratch.
    budget = int(min(40 * _MIB, max(8 * _MIB, phys * 5 // 16)))
    limit = int(min(phys * 3 // 4, budget + 8 * _MIB))
    return budget, limit


def _round_up(x, m):
    return -(-x // m) * m


def _pick_row_tile(nc, hw_padded, itemsize, sublane, budget):
    """Largest row tile whose pipelined buffers fit the VMEM budget.

    Per row: double-buffered input + output blocks in the I/O dtype plus
    ~2 tile-sized f32 temps for the fused stats/affine math.
    Returns 0 when even `sublane` rows do not fit (-> HW-split fallback).
    """
    per_row = hw_padded * (2 * itemsize + 2 * itemsize + 2 * 4)
    cap = budget // per_row
    if nc <= cap:
        return nc                     # full extent: always a legal block dim
    if cap < sublane:
        return 0
    return int((cap // sublane) * sublane)


def _instnorm_fused_kernel(x_ref, wb_ref, o_ref, *, eps, inv_count):
    # x_ref block: (TR, HWp) in the input dtype (no whole-tile f32 copy).
    x = x_ref[...]
    # Single pass: sum and sum-of-squares, accumulated in f32.
    s = jnp.sum(x, axis=-1, keepdims=True, dtype=jnp.float32)
    sq = jnp.sum(x * x, axis=-1, keepdims=True, dtype=jnp.float32)
    mean = s * inv_count
    var = jnp.maximum(sq * inv_count - mean * mean, 0.0)   # clamp fp cancellation
    inv = lax.rsqrt(var + eps)                              # EUP slot (~free)

    wb = wb_ref[...]                                        # (TR, 2) f32
    scale = wb[:, 0:1] * inv
    offset = wb[:, 1:2] - mean * scale
    # Fused affine: out = x * scale + offset, lane-dense store.
    o_ref[...] = (x * scale + offset).astype(o_ref.dtype)


def _instnorm_stats_kernel(x_ref, stat_ref, sum_sc, sq_sc, *, inv_count):
    # HW-split fallback, pass 1: accumulate per-row sum / sumsq across hw chunks.
    k = pl.program_id(1)

    @pl.when(k == 0)
    def _():
        sum_sc[...] = jnp.zeros_like(sum_sc)
        sq_sc[...] = jnp.zeros_like(sq_sc)

    x = x_ref[...]
    sum_sc[...] += jnp.sum(x, axis=-1, keepdims=True, dtype=jnp.float32)
    sq_sc[...] += jnp.sum(x * x, axis=-1, keepdims=True, dtype=jnp.float32)

    @pl.when(k == pl.num_programs(1) - 1)
    def _():
        mean = sum_sc[...] * inv_count
        var = jnp.maximum(sq_sc[...] * inv_count - mean * mean, 0.0)
        stat_ref[...] = jnp.concatenate([mean, var], axis=-1)


def _instnorm_affine_kernel(x_ref, stat_ref, wb_ref, o_ref, *, eps):
    # HW-split fallback, pass 2: apply the per-row affine.
    mean = stat_ref[:, 0:1]
    var = stat_ref[:, 1:2]
    inv = lax.rsqrt(var + eps)
    wb = wb_ref[...]
    scale = wb[:, 0:1] * inv
    offset = wb[:, 1:2] - mean * scale
    o_ref[...] = (x_ref[...] * scale + offset).astype(o_ref.dtype)


def instance_norm2d(x, weight, bias, *, eps=1e-5, hw_block=None):
    """x: (N, C, H, W); weight/bias: any array with C elements (e.g. (C,1,1))."""
    N, C, H, W = x.shape
    NC, HW = N * C, H * W
    inv_count = 1.0 / HW

    # Per-row (weight, bias) merged into a single (NC, 2) array -> one DMA per step.
    w_row = jnp.broadcast_to(jnp.reshape(weight, (1, C)).astype(jnp.float32), (N, C))
    b_row = jnp.broadcast_to(jnp.reshape(bias, (1, C)).astype(jnp.float32), (N, C))
    wb = jnp.stack([w_row.reshape(NC), b_row.reshape(NC)], axis=1)   # (NC, 2) f32

    itemsize = jnp.dtype(x.dtype).itemsize
    sublane = max(8, 32 // max(itemsize, 1))   # packed-sublane multiple: 8/16/32
    budget, vmem_cap = _vmem_budgets()

    hw_pad128 = _round_up(HW, 128)
    tr = _pick_row_tile(NC, hw_pad128, itemsize, sublane, budget)
    if hw_block is not None:
        tr = 0  # force the HW-split path (testing / very large spatial dims)

    x2 = x.reshape(NC, HW)   # free, contiguous view; no transposes

    if tr > 0:
        # ---- fast path: one fused sweep, full spatial extent per block (2 HBM passes).
        HWp = hw_pad128
        if HWp != HW:
            # Lane-dense pad; zeros do not perturb sum/sumsq (true count used).
            x2 = jnp.pad(x2, ((0, 0), (0, HWp - HW)))
        grid = (pl.cdiv(NC, tr),)
        block_bytes = tr * HWp * itemsize
        vmem_limit = int(min(vmem_cap, max(16 * _MIB, 10 * block_bytes + 2 * _MIB)))

        # Deeper pipelining only when blocks are small and the grid is long.
        if block_bytes < 512 * 1024 and grid[0] > 4:
            x_spec = pl.BlockSpec((tr, HWp), lambda i: (i, 0),
                                  pipeline_mode=pl.Buffered(3))
            o_spec = pl.BlockSpec((tr, HWp), lambda i: (i, 0),
                                  pipeline_mode=pl.Buffered(3))
        else:
            x_spec = pl.BlockSpec((tr, HWp), lambda i: (i, 0))
            o_spec = pl.BlockSpec((tr, HWp), lambda i: (i, 0))

        out2 = pl.pallas_call(
            functools.partial(_instnorm_fused_kernel, eps=eps, inv_count=inv_count),
            out_shape=jax.ShapeDtypeStruct((NC, HWp), x.dtype),
            grid=grid,
            in_specs=[x_spec, pl.BlockSpec((tr, 2), lambda i: (i, 0))],
            out_specs=o_spec,
            compiler_params=pltpu.CompilerParams(
                # TODO(synk): on v7x, confirm both TensorCores receive row blocks;
                # switch to pltpu.CORE_PARALLEL if a profile shows one idle TC.
                dimension_semantics=("parallel",),
                vmem_limit_bytes=vmem_limit,
            ),
        )(x2, wb)
    else:
        # ---- HW-split fallback (huge H*W): stats sweep + affine sweep (3 HBM passes).
        tr = NC if NC < sublane else sublane
        per_elem = 4 * itemsize + 4          # in + out double-buffered + f32 temp
        if hw_block is not None:
            thw = int(hw_block)
        else:
            thw = (budget // (tr * per_elem)) // 128 * 128
        thw = max(128, min(thw, hw_pad128))
        HWp = _round_up(HW, thw)             # pad so hw chunks never overhang
        if HWp != HW:
            x2 = jnp.pad(x2, ((0, 0), (0, HWp - HW)))
        rows_grid = pl.cdiv(NC, tr)
        hw_grid = HWp // thw

        stats = pl.pallas_call(
            functools.partial(_instnorm_stats_kernel, inv_count=inv_count),
            out_shape=jax.ShapeDtypeStruct((NC, 2), jnp.float32),
            grid=(rows_grid, hw_grid),
            in_specs=[pl.BlockSpec((tr, thw), lambda i, k: (i, k))],
            out_specs=pl.BlockSpec((tr, 2), lambda i, k: (i, 0)),
            scratch_shapes=[pltpu.VMEM((tr, 1), jnp.float32),
                            pltpu.VMEM((tr, 1), jnp.float32)],
            compiler_params=pltpu.CompilerParams(
                dimension_semantics=("parallel", "arbitrary"),
                vmem_limit_bytes=vmem_cap,
            ),
        )(x2)

        out2 = pl.pallas_call(
            functools.partial(_instnorm_affine_kernel, eps=eps),
            out_shape=jax.ShapeDtypeStruct((NC, HWp), x.dtype),
            grid=(rows_grid, hw_grid),
            in_specs=[pl.BlockSpec((tr, thw), lambda i, k: (i, k)),
                      pl.BlockSpec((tr, 2), lambda i, k: (i, 0)),
                      pl.BlockSpec((tr, 2), lambda i, k: (i, 0))],
            out_specs=pl.BlockSpec((tr, thw), lambda i, k: (i, k)),
            compiler_params=pltpu.CompilerParams(
                dimension_semantics=("parallel", "parallel"),
                vmem_limit_bytes=vmem_cap,
            ),
        )(x2, stats, wb)

    if out2.shape[1] != HW:
        out2 = out2[:, :HW]
    return out2.reshape(N, C, H, W)


def _reference(x, weight, bias, eps=1e-5):
    N, C, H, W = x.shape
    xr = x.reshape(N, C, -1).astype(jnp.float32)
    mean = jnp.mean(xr, axis=2, keepdims=True)
    var = jnp.mean((xr - mean) ** 2, axis=2, keepdims=True)
    xn = ((xr - mean) / jnp.sqrt(var + eps)).reshape(N, C, H, W)
    w = jnp.reshape(weight, (1, C, 1, 1)).astype(jnp.float32)
    b = jnp.reshape(bias, (1, C, 1, 1)).astype(jnp.float32)
    return xn * w + b


if __name__ == "__main__":
    key = jax.random.PRNGKey(0)
    k1, k2, k3, k4 = jax.random.split(key, 4)

    # Case 1: the module's canonical small shape (f32, HW multiple of 128).
    N, C, H, W = 2, 4, 16, 16
    x = jax.random.normal(k1, (N, C, H, W), dtype=jnp.float32)
    weight = jnp.ones((C, 1, 1), dtype=jnp.float32)   # module init: ones / zeros
    bias = jnp.zeros((C, 1, 1), dtype=jnp.float32)
    # TODO(synk): running_mean/running_var/momentum are declared by the module
    # but unused in its forward pass, so they are not reproduced here.
    out = jax.block_until_ready(instance_norm2d(x, weight, bias, eps=1e-5))
    ref = _reference(x, weight, bias, eps=1e-5)
    assert out.shape == (N, C, H, W)
    assert jnp.allclose(out.astype(jnp.float32), ref, atol=1e-5, rtol=1e-5)

    # Case 2: bf16 input (packed-sublane row tile, f32 accumulation in-kernel).
    xb = jax.random.normal(k2, (2, 8, 16, 16), dtype=jnp.float32).astype(jnp.bfloat16)
    wb2 = jax.random.normal(k3, (8, 1, 1), dtype=jnp.float32) * 0.1 + 1.0
    bb2 = jax.random.normal(k4, (8, 1, 1), dtype=jnp.float32) * 0.1
    outb = jax.block_until_ready(instance_norm2d(xb, wb2, bb2, eps=1e-5))
    refb = _reference(xb, wb2, bb2, eps=1e-5)
    assert jnp.allclose(outb.astype(jnp.float32), refb, atol=6e-2, rtol=6e-2)

    # Case 3: lane-sparse spatial dims (7x7 -> zero-padded to 128 lanes).
    xs = jax.random.normal(k3, (2, 16, 7, 7), dtype=jnp.float32)
    ws = jnp.ones((16, 1, 1), dtype=jnp.float32)
    bs = jnp.zeros((16, 1, 1), dtype=jnp.float32)
    outs = jax.block_until_ready(instance_norm2d(xs, ws, bs, eps=1e-5))
    refs = _reference(xs, ws, bs, eps=1e-5)
    assert jnp.allclose(outs.astype(jnp.float32), refs, atol=1e-5, rtol=1e-5)

    # Case 4: exercise the HW-split fallback path (forced small hw chunk).
    xf = jax.random.normal(k4, (2, 4, 8, 32), dtype=jnp.float32)
    wf = jnp.ones((4, 1, 1), dtype=jnp.float32)
    bf = jnp.zeros((4, 1, 1), dtype=jnp.float32)
    outf = jax.block_until_ready(instance_norm2d(xf, wf, bf, eps=1e-5, hw_block=128))
    reff = _reference(xf, wf, bf, eps=1e-5)
    assert jnp.allclose(outf.astype(jnp.float32), reff, atol=1e-5, rtol=1e-5)

    print("KERNEL_OK")
</pallas_src>

<mosaic_0001>
module attributes {stable_mosaic.version = 11 : i64} {
  func.func @_instnorm_fused_kernel(%arg0: i32, %arg1: memref<8x256xf32, #tpu.memory_space<vmem>>, %arg2: memref<8x2xf32, #tpu.memory_space<vmem>>, %arg3: memref<8x256xf32, #tpu.memory_space<vmem>>) attributes {dimension_semantics = [#tpu.dimension_semantics<parallel>], iteration_bounds = array<i64: 1>, scalar_prefetch = 0 : i64, scratch_operands = 0 : i64, tpu.core_type = #tpu.core_type<tc>, window_params = [{transform_indices = @transform_0, window_bounds = array<i64: 8, 256>}, {transform_indices = @transform_1, window_bounds = array<i64: 8, 2>}, {transform_indices = @transform_2, window_bounds = array<i64: 8, 256>}]} {
    %c0 = arith.constant 0 : index
    %c0_0 = arith.constant 0 : index
    %0 = vector.load %arg1[%c0, %c0_0] : memref<8x256xf32, #tpu.memory_space<vmem>>, vector<8x256xf32>
    %cst = arith.constant dense<0.000000e+00> : vector<8xf32>
    %1 = vector.multi_reduction <add>, %0, %cst [1] : vector<8x256xf32> to vector<8xf32>
    %2 = vector.shape_cast %1 : vector<8xf32> to vector<8x1xf32>
    %3 = arith.mulf %0, %0 : vector<8x256xf32>
    %cst_1 = arith.constant dense<0.000000e+00> : vector<8xf32>
    %4 = vector.multi_reduction <add>, %3, %cst_1 [1] : vector<8x256xf32> to vector<8xf32>
    %5 = vector.shape_cast %4 : vector<8xf32> to vector<8x1xf32>
    %cst_2 = arith.constant 3.906250e-03 : f32
    %6 = vector.broadcast %cst_2 : f32 to vector<8x1xf32>
    %7 = arith.mulf %2, %6 : vector<8x1xf32>
    %cst_3 = arith.constant 3.906250e-03 : f32
    %8 = vector.broadcast %cst_3 : f32 to vector<8x1xf32>
    %9 = arith.mulf %5, %8 : vector<8x1xf32>
    %10 = arith.mulf %7, %7 : vector<8x1xf32>
    %11 = arith.subf %9, %10 : vector<8x1xf32>
    %cst_4 = arith.constant 0.000000e+00 : f32
    %12 = vector.broadcast %cst_4 : f32 to vector<8x1xf32>
    %13 = arith.maximumf %11, %12 : vector<8x1xf32>
    %cst_5 = arith.constant 9.99999974E-6 : f32
    %14 = vector.broadcast %cst_5 : f32 to vector<8x1xf32>
    %15 = arith.addf %13, %14 : vector<8x1xf32>
    %16 = math.rsqrt %15 : vector<8x1xf32>
    %c0_6 = arith.constant 0 : index
    %c0_7 = arith.constant 0 : index
    %17 = vector.load %arg2[%c0_6, %c0_7] : memref<8x2xf32, #tpu.memory_space<vmem>>, vector<8x2xf32>
    %18 = vector.extract_strided_slice %17 {offsets = [0, 0], sizes = [8, 1], strides = [1, 1]} : vector<8x2xf32> to vector<8x1xf32>
    %19 = arith.mulf %18, %16 : vector<8x1xf32>
    %20 = vector.extract_strided_slice %17 {offsets = [0, 1], sizes = [8, 1], strides = [1, 1]} : vector<8x2xf32> to vector<8x1xf32>
    %21 = arith.mulf %7, %19 : vector<8x1xf32>
    %22 = arith.subf %20, %21 : vector<8x1xf32>
    %23 = vector.broadcast %19 : vector<8x1xf32> to vector<8x256xf32>
    %24 = arith.mulf %0, %23 : vector<8x256xf32>
    %25 = vector.broadcast %22 : vector<8x1xf32> to vector<8x256xf32>
    %26 = arith.addf %24, %25 : vector<8x256xf32>
    %c0_8 = arith.constant 0 : index
    %c0_9 = arith.constant 0 : index
    %27 = vector.load %arg3[%c0_8, %c0_9] : memref<8x256xf32, #tpu.memory_space<vmem>>, vector<8x256xf32>
    tpu.vector_store %arg3[%c0_8, %c0_9], %26 {strides = array<i32>} : memref<8x256xf32, #tpu.memory_space<vmem>>, vector<8x256xf32>,
    return
  }
  func.func @transform_0(%arg0: i32) -> (i32, i32) {
    %c0_i32 = arith.constant 0 : i32
    %c0_i32_0 = arith.constant 0 : i32
    return %arg0, %c0_i32 : i32, i32
  }
  func.func @transform_1(%arg0: i32) -> (i32, i32) {
    %c0_i32 = arith.constant 0 : i32
    %c0_i32_0 = arith.constant 0 : i32
    return %arg0, %c0_i32 : i32, i32
  }
  func.func @transform_2(%arg0: i32) -> (i32, i32) {
    %c0_i32 = arith.constant 0 : i32
    %c0_i32_0 = arith.constant 0 : i32
    return %arg0, %c0_i32 : i32, i32
  }
}

</mosaic_0001>

<llo_original>
// kernel: tpu_custom_call.1
$region0: #{tpu_custom_call.1}
  #allocation0 [shape = 'u32[]', space=smem, size = 0x4, offset = 0x4, fixed_abs, tag = 'smem constant byte address 0x4 - core index']
  #allocation1 [shape = 'u32[144,128]{1,0:T(1,128)}', space=vmem, size = 0x12000, scoped, tag = 'internal scratch']
  %s0 = inlined_call_operand.hbm [shape: f32[8,256], index: 0, kind: input, shape index: {}]
  %s1 = inlined_call_operand.vmem [shape: f32[8,2], index: 1, kind: input, shape index: {}]
  %s2 = inlined_call_operand.hbm [shape: f32[8,256], index: 2, kind: output, shape index: {}]
  %s3 = sld [smem:[#allocation0]]
  $region22: #{tpu_custom_call.1} parent=0
    _
  %s5 = ssub.s32 1, %s3
  %s6 = scalar_select 0, %s5, %s3
  $region1: #{tpu_custom_call.1} parent=0
    #allocation2 [shape = 'u8[8192]{0}', space=vmem, size = 0x2000, scoped, tag = 'input window, operand 0, single buffered']
    #allocation3 [shape = 's32[1]{0}', space=sflag, size = 0x4, scoped, tag = 'scoped memory for tpu_custom_call.1']
    #allocation4 [shape = 's32[1]{0}', space=sflag, size = 0x4, scoped, tag = 'scoped memory for tpu_custom_call.1']
    #allocation5 [shape = 'u8[8192]{0}', space=vmem, size = 0x2000, scoped, tag = 'output window, operand 0, single buffered']
    %7 = vsyncpa [#allocation3], 0
    %8 = vsyncpa [#allocation4], 0
    // Predicated region
    $region2: #{tpu_custom_call.1} parent=1 // pred_check
      _
    $region3: #{tpu_custom_call.1} parent=1 // pred_check_branch
      %10 = sbr.rel (0) target = $region5
    $region4: #{tpu_custom_call.1} parent=1 // pred_region
      %s12 = ssub.s32 256, 256
      %13 = vsyncadd [#allocation3], %s12
      %s15 = sshll.u32 [#allocation2], 4
      %s16 = int_to_ptr.vmem [resolvable:$true] %s15
      %18 = dma.hbm_to_vmem [thread:$0]  %s0, 256, %s16, [#allocation3]
    $region5: #{tpu_custom_call.1} parent=1 // pred_fallthru
      _
    // Predicated region
    $region6: #{tpu_custom_call.1} parent=1 // pred_check
      _
    $region7: #{tpu_custom_call.1} parent=1 // pred_check_branch
      %20 = sbr.rel (0) target = $region9
    $region8: #{tpu_custom_call.1} parent=1 // pred_region
      _
    $region9: #{tpu_custom_call.1} parent=1 // pred_fallthru
      _
    // Predicated region
    $region10: #{tpu_custom_call.1} parent=1 // pred_check
      _
    $region11: #{tpu_custom_call.1} parent=1 // pred_check_branch
      %22 = sbr.rel (0) target = $region13
    $region12: #{tpu_custom_call.1} parent=1 // pred_region
      %23 = dma.done [#allocation3], 256
    $region13: #{tpu_custom_call.1} parent=1 // pred_fallthru
      _
    %v24 = vld [vmem:[#allocation2] sm:$0xff]
    %v25 = vld [vmem:[#allocation2 + $0x8] sm:$0xff]
    %v26 = vadd.f32 %v24, %v25
    %27 = vadd.xlane.f32.xlu0 %v26
    %v28 = vpop.xlane.xlu0 %27
    %v29 = vmul.f32 %v24, %v24
    %v30 = vmul.f32 %v25, %v25
    %v31 = vadd.f32 %v29, %v30
    %32 = vadd.xlane.f32.xlu0 %v31
    %v33 = vpop.xlane.xlu0 %32
    %v34 = vmul.f32 %v28, 0.00390625
    %v35 = vmul.f32 %v33, 0.00390625
    %v36 = vmul.f32 %v34, %v34
    %v37 = vsub.f32 %v35, %v36
    %v38 = vmax.f32 %v37, 0.0
    %v39 = vadd.f32 %v38, 1e-05
    %v40 = vrsqrt.pop %v39
    %v41 = vld [vmem:[%s1] sm:$0xff]
    %v42 = vmul.f32 %v41, %v40
    %v43 = vmul.f32 %v34, %v42
    %45 = vrot.lane.b32.xlu0 %v43, 1
    %v46 = vpop.permute.xlu0 %45
    %v48 = vsub.f32 %v41, %v46
    %50 = vset.pattern.permute.xlu0 0
    %51 = vperm.xlu0 %50, %v42
    %v52 = vpop.permute.xlu0 %51
    %v54 = vmul.f32 %v24, %v52
    %v55 = vmul.f32 %v25, %v52
    %57 = vset.pattern.permute.xlu0 1
    %58 = vperm.xlu0 %57, %v48
    %v59 = vpop.permute.xlu0 %58
    %v61 = vadd.f32 %v54, %v59
    %v62 = vadd.f32 %v55, %v59
    %63 = vst [vmem:[#allocation5] sm:$0xff] %v61
    %64 = vst [vmem:[#allocation5 + $0x8] sm:$0xff] %v62
    // Predicated region
    $region14: #{tpu_custom_call.1} parent=1 // pred_check
      _
    $region15: #{tpu_custom_call.1} parent=1 // pred_check_branch
      %66 = sbr.rel (0) target = $region17
    $region16: #{tpu_custom_call.1} parent=1 // pred_region
      %s68 = ssub.s32 256, 256
      %69 = vsyncadd [#allocation4], %s68
      %s71 = sshll.u32 [#allocation5], 4
      %s72 = int_to_ptr.vmem [resolvable:$true] %s71
      %74 = dma.vmem_to_hbm [thread:$0]  %s72, 256, %s2, [#allocation4]
    $region17: #{tpu_custom_call.1} parent=1 // pred_fallthru
      _
    // Predicated region
    $region18: #{tpu_custom_call.1} parent=1 // pred_check
      _
    $region19: #{tpu_custom_call.1} parent=1 // pred_check_branch
      %76 = sbr.rel (0) target = $region21
    $region20: #{tpu_custom_call.1} parent=1 // pred_region
      %77 = dma.done [#allocation4], 256
    $region21: #{tpu_custom_call.1} parent=1 // pred_fallthru
      _
    %78 = vsyncpa [#allocation3], 1
    %79 = vsyncpa [#allocation4], 1

</llo_original>
